<compile_context>
chip_gen: v7x
topology: tpu7x:2x2x1
jax: 0.10.0
libtpu: 0.0.40
codegen_flags: <defaults>
</compile_context>

<pallas_src>
import functools

import jax
import jax.numpy as jnp
from jax.experimental import pallas as pl
from jax.experimental.pallas import tpu as pltpu


def _pyhessian_loss_kernel(scal_ref,     # SMEM f32 (4,): [reg, 1/n_ic, 1/n_bc, 1/N]
                           bnd_ref,      # SMEM i32 (2,): [n_ic, N - n_bc]
                           u_row_ref,    # VMEM (1, TM)  lane-dense tile of u
                           t_row_ref,    # VMEM (1, TM)  lane-dense tile of targets
                           f_ref,        # VMEM (TM, 1)  source-term column tile
                           L_ref,        # VMEM (TM, N)  operator row tile (dominant stream)
                           u_col_ref,    # VMEM (N, 1)   full u column (resident, for L @ u)
                           out_ref,      # SMEM (1, 1)   scalar loss
                           acc_icbc_ref, # VMEM (1, TM)  elementwise accumulator (ic + bc)
                           acc_pde_ref): # VMEM (TM, 1)  elementwise accumulator (pde)
    i = pl.program_id(0)

    @pl.when(i == 0)
    def _init():
        acc_icbc_ref[...] = jnp.zeros_like(acc_icbc_ref)
        acc_pde_ref[...] = jnp.zeros_like(acc_pde_ref)

    # ---- ic / bc terms: lane-dense elementwise, masks built in-kernel -------
    d = u_row_ref[...] - t_row_ref[...]
    d2 = d * d
    blk = u_row_ref.shape[1]
    gidx = i * blk + jax.lax.broadcasted_iota(jnp.int32, d2.shape, 1)
    ic_w = (gidx < bnd_ref[0]).astype(jnp.float32) * scal_ref[1]   # 1/n_ic on ic points
    bc_w = (gidx >= bnd_ref[1]).astype(jnp.float32) * scal_ref[2]  # 1/n_bc on bc points
    acc_icbc_ref[...] += (ic_w + bc_w) * d2

    # ---- PDE residual for this row tile: r = L_tile @ u - f_tile ------------
    r = jnp.dot(L_ref[...], u_col_ref[...],
                preferred_element_type=jnp.float32) - f_ref[...]
    acc_pde_ref[...] += r * r

    # ---- finalize: single cross-lane reduce + scalar store on the last step -
    @pl.when(i == pl.num_programs(0) - 1)
    def _finalize():
        reg = scal_ref[0]
        inv_n = scal_ref[3]
        out_ref[0, 0] = (jnp.sum(acc_icbc_ref[...])
                         + reg * inv_n * jnp.sum(acc_pde_ref[...]))


def _vmem_capacity_bytes():
    try:
        return int(pltpu.get_tpu_info().vmem_capacity_bytes)
    except Exception:
        # Conservative (v7x per-core sized) fallback if the query is unavailable.
        return 64 * 1024 * 1024


def _pick_tile_m(N, l_itemsize, vmem_budget):
    """Largest legal row tile of L whose pipeline buffers fit `vmem_budget`."""
    def fits(tm):
        l_slab = 2 * tm * N * l_itemsize          # double-buffered L row slab (dominant)
        u_res = 2 * N * 128 * 4                    # resident u column (padded to 128 lanes)
        vecs = 2 * (2 * 8 * tm * 4 + tm * 128 * 4)  # u/t row tiles + f column tile
        acc = 8 * tm * 4 + tm * 128 * 4            # VMEM accumulators
        return l_slab + u_res + vecs + acc <= vmem_budget

    cands = sorted({c for c in (N, 4096, 2048, 1024, 512, 256, 128)
                    if 0 < c <= N and N % c == 0 and (c % 128 == 0 or c == N)},
                   reverse=True)
    for c in cands:
        if fits(c):
            return c
    # Smallest legal tile; may still be tight for enormous N (see TODO above).
    return cands[-1]


def pyhessian_loss(u, targets, f, L, reg, n_ic, n_bc, *,
                   tile_m=None, use_bf16_operator=False):
    """loss = mean_ic((u-t)^2) + mean_bc((u-t)^2) + reg * mean((L@u - f)^2).

    ic points are rows [0, n_ic); bc points are rows [N - n_bc, N).
    """
    N = u.shape[0]

    u = u.reshape(N, 1).astype(jnp.float32)
    targets = targets.reshape(N, 1).astype(jnp.float32)
    f = f.reshape(N, 1).astype(jnp.float32)
    L = L.astype(jnp.float32)

    l_dtype = jnp.bfloat16 if use_bf16_operator else jnp.float32
    L_op = L.astype(l_dtype)
    u_col = u.astype(l_dtype)

    vmem_cap = _vmem_capacity_bytes()
    if tile_m is None:
        tile_m = _pick_tile_m(N, jnp.dtype(l_dtype).itemsize,
                              int(vmem_cap * 0.55))
    assert N % tile_m == 0, (N, tile_m)
    assert tile_m % 128 == 0 or tile_m == N, (N, tile_m)
    vmem_limit = int(min(vmem_cap, 128 * 1024 * 1024) * 0.8)

    # Guard against empty ic/bc sets (denominator would be inf/nan otherwise;
    # the mask contributes zero anyway so the clamped inverse is exact).
    inv_ic = 1.0 / max(int(n_ic), 1)
    inv_bc = 1.0 / max(int(n_bc), 1)
    scal = jnp.array([reg, inv_ic, inv_bc, 1.0 / N], dtype=jnp.float32)
    bnd = jnp.array([int(n_ic), N - int(n_bc)], dtype=jnp.int32)

    # Lane-dense row layout for the elementwise streams.
    u_row = u.reshape(1, N)
    t_row = targets.reshape(1, N)

    grid = (N // tile_m,)

    out = pl.pallas_call(
        _pyhessian_loss_kernel,
        out_shape=jax.ShapeDtypeStruct((1, 1), jnp.float32),
        grid_spec=pl.GridSpec(
            grid=grid,
            in_specs=[
                pl.BlockSpec(memory_space=pltpu.MemorySpace.SMEM),   # scal
                pl.BlockSpec(memory_space=pltpu.MemorySpace.SMEM),   # bounds
                pl.BlockSpec((1, tile_m), lambda i: (0, i)),         # u row tile
                pl.BlockSpec((1, tile_m), lambda i: (0, i)),         # targets row tile
                pl.BlockSpec((tile_m, 1), lambda i: (i, 0)),         # f column tile
                pl.BlockSpec((tile_m, N), lambda i: (i, 0)),         # L row tile
                pl.BlockSpec((N, 1), lambda i: (0, 0)),              # u column (resident)
            ],
            out_specs=pl.BlockSpec(memory_space=pltpu.MemorySpace.SMEM),
            scratch_shapes=[
                pltpu.VMEM((1, tile_m), jnp.float32),                # ic+bc accumulator
                pltpu.VMEM((tile_m, 1), jnp.float32),                # pde accumulator
            ],
        ),
        compiler_params=pltpu.CompilerParams(
            dimension_semantics=("arbitrary",),
            vmem_limit_bytes=vmem_limit,
        ),
    )(scal, bnd, u_row, t_row, f, L_op, u_col)
    return out[0, 0]


if __name__ == "__main__":
    key = jax.random.PRNGKey(0)
    k_in, k_u, k_t, k_l = jax.random.split(key, 4)

    N = 256          # number of collocation points
    n_ic = 32        # initial-condition points (first rows)
    n_bc = 32        # boundary points (last rows)
    reg = 0.1        # params.reg

    # self.inputs: (x, t) coordinates for each collocation point
    inputs = jax.random.uniform(k_in, (N, 2), dtype=jnp.float32)

    # forward(u, targets)
    u = jax.random.normal(k_u, (N, 1), dtype=jnp.float32)
    targets = jax.random.normal(k_t, (N, 1), dtype=jnp.float32)

    # Deterministic synthetic PDE operator: discrete Laplacian + small random part.
    lap = (-2.0 * jnp.eye(N)
           + jnp.eye(N, k=1) + jnp.eye(N, k=-1)).astype(jnp.float32)
    L = lap + 0.01 * jax.random.normal(k_l, (N, N), dtype=jnp.float32)

    # Source term derived from self.inputs (glue, elementwise).
    f = jnp.sin(inputs[:, :1] * 3.0) * jnp.cos(inputs[:, 1:] * 2.0)

    loss = pyhessian_loss(u, targets, f, L, reg, n_ic, n_bc)
    loss = jax.block_until_ready(loss)

    # Pure-JAX reference for sanity.
    ic_mask = (jnp.arange(N) < n_ic).astype(jnp.float32)[:, None]
    bc_mask = (jnp.arange(N) >= N - n_bc).astype(jnp.float32)[:, None]
    diff = u - targets
    ref_ic = jnp.sum(ic_mask * diff * diff) / n_ic
    ref_bc = jnp.sum(bc_mask * diff * diff) / n_bc
    resid = L @ u - f
    ref_pde = jnp.mean(resid * resid)
    ref = ref_ic + ref_bc + reg * ref_pde

    assert jnp.allclose(loss, ref, rtol=1e-4, atol=1e-5), (loss, ref)
    print("KERNEL_OK")
</pallas_src>

<mosaic_0001>
module attributes {stable_mosaic.version = 11 : i64} {
  func.func @_pyhessian_loss_kernel(%arg0: i32, %arg1: memref<4xf32, #tpu.memory_space<smem>>, %arg2: memref<2xi32, #tpu.memory_space<smem>>, %arg3: memref<1x256xf32, #tpu.memory_space<vmem>>, %arg4: memref<1x256xf32, #tpu.memory_space<vmem>>, %arg5: memref<256x1xf32, #tpu.memory_space<vmem>>, %arg6: memref<256x256xf32, #tpu.memory_space<vmem>>, %arg7: memref<256x1xf32, #tpu.memory_space<vmem>>, %arg8: memref<1x1xf32, #tpu.memory_space<smem>>, %arg9: memref<1x256xf32, #tpu.memory_space<vmem>>, %arg10: memref<256x1xf32, #tpu.memory_space<vmem>>) attributes {dimension_semantics = [#tpu.dimension_semantics<arbitrary>], iteration_bounds = array<i64: 1>, scalar_prefetch = 0 : i64, scratch_operands = 2 : i64, tpu.core_type = #tpu.core_type<tc>, window_params = [{transform_indices = @transform_0, window_bounds = array<i64: 4>}, {transform_indices = @transform_1, window_bounds = array<i64: 2>}, {transform_indices = @transform_2, window_bounds = array<i64: 1, 256>}, {transform_indices = @transform_3, window_bounds = array<i64: 1, 256>}, {transform_indices = @transform_4, window_bounds = array<i64: 256, 1>}, {transform_indices = @transform_5, window_bounds = array<i64: 256, 256>}, {pipeline_mode = #tpu.pipeline_mode<synchronous>, transform_indices = @transform_6, window_bounds = array<i64: 256, 1>}, {transform_indices = @transform_7, window_bounds = array<i64: 1, 1>}]} {
    %c0_i32 = arith.constant 0 : i32
    %0 = arith.cmpi eq, %arg0, %c0_i32 : i32
    %1 = arith.extui %0 : i1 to i32
    %c0_i32_0 = arith.constant 0 : i32
    %2 = arith.cmpi ne, %1, %c0_i32_0 : i32
    scf.if %2 {
      %cst_22 = arith.constant 0.000000e+00 : f32
      %44 = vector.broadcast %cst_22 : f32 to vector<1x256xf32>
      %c0_23 = arith.constant 0 : index
      %c0_24 = arith.constant 0 : index
      %45 = vector.load %arg9[%c0_23, %c0_24] : memref<1x256xf32, #tpu.memory_space<vmem>>, vector<1x256xf32>
      tpu.vector_store %arg9[%c0_23, %c0_24], %44 {strides = array<i32>} : memref<1x256xf32, #tpu.memory_space<vmem>>, vector<1x256xf32>,
      %cst_25 = arith.constant 0.000000e+00 : f32
      %46 = vector.broadcast %cst_25 : f32 to vector<256x1xf32>
      %c0_26 = arith.constant 0 : index
      %c0_27 = arith.constant 0 : index
      %47 = vector.load %arg10[%c0_26, %c0_27] : memref<256x1xf32, #tpu.memory_space<vmem>>, vector<256x1xf32>
      tpu.vector_store %arg10[%c0_26, %c0_27], %46 {strides = array<i32>} : memref<256x1xf32, #tpu.memory_space<vmem>>, vector<256x1xf32>,
    } else {
    }
    %c0 = arith.constant 0 : index
    %c0_1 = arith.constant 0 : index
    %3 = vector.load %arg3[%c0, %c0_1] : memref<1x256xf32, #tpu.memory_space<vmem>>, vector<1x256xf32>
    %c0_2 = arith.constant 0 : index
    %c0_3 = arith.constant 0 : index
    %4 = vector.load %arg4[%c0_2, %c0_3] : memref<1x256xf32, #tpu.memory_space<vmem>>, vector<1x256xf32>
    %5 = arith.subf %3, %4 : vector<1x256xf32>
    %6 = arith.mulf %5, %5 : vector<1x256xf32>
    %c256_i32 = arith.constant 256 : i32
    %7 = arith.muli %arg0, %c256_i32 : i32
    %8 = tpu.iota {dimensions = array<i32: 1>} : vector<1x256xi32>
    %9 = vector.broadcast %7 : i32 to vector<1x256xi32>
    %10 = arith.addi %9, %8 : vector<1x256xi32>
    %c0_4 = arith.constant 0 : index
    %11 = memref.load %arg2[%c0_4] : memref<2xi32, #tpu.memory_space<smem>>
    %12 = vector.broadcast %11 : i32 to vector<1x256xi32>
    %13 = arith.cmpi slt, %10, %12 : vector<1x256xi32>
    %14 = arith.extui %13 : vector<1x256xi1> to vector<1x256xi32>
    %15 = arith.sitofp %14 : vector<1x256xi32> to vector<1x256xf32>
    %c1 = arith.constant 1 : index
    %16 = memref.load %arg1[%c1] : memref<4xf32, #tpu.memory_space<smem>>
    %17 = vector.broadcast %16 : f32 to vector<1x256xf32>
    %18 = arith.mulf %15, %17 : vector<1x256xf32>
    %c1_5 = arith.constant 1 : index
    %19 = memref.load %arg2[%c1_5] : memref<2xi32, #tpu.memory_space<smem>>
    %20 = vector.broadcast %19 : i32 to vector<1x256xi32>
    %21 = arith.cmpi sge, %10, %20 : vector<1x256xi32>
    %22 = arith.extui %21 : vector<1x256xi1> to vector<1x256xi32>
    %23 = arith.sitofp %22 : vector<1x256xi32> to vector<1x256xf32>
    %c2 = arith.constant 2 : index
    %24 = memref.load %arg1[%c2] : memref<4xf32, #tpu.memory_space<smem>>
    %25 = vector.broadcast %24 : f32 to vector<1x256xf32>
    %26 = arith.mulf %23, %25 : vector<1x256xf32>
    %c0_6 = arith.constant 0 : index
    %c0_7 = arith.constant 0 : index
    %27 = vector.load %arg9[%c0_6, %c0_7] : memref<1x256xf32, #tpu.memory_space<vmem>>, vector<1x256xf32>
    %28 = arith.addf %18, %26 : vector<1x256xf32>
    %29 = arith.mulf %28, %6 : vector<1x256xf32>
    %30 = arith.addf %27, %29 : vector<1x256xf32>
    %c0_8 = arith.constant 0 : index
    %c0_9 = arith.constant 0 : index
    %31 = vector.load %arg9[%c0_8, %c0_9] : memref<1x256xf32, #tpu.memory_space<vmem>>, vector<1x256xf32>
    tpu.vector_store %arg9[%c0_8, %c0_9], %30 {strides = array<i32>} : memref<1x256xf32, #tpu.memory_space<vmem>>, vector<1x256xf32>,
    %c0_10 = arith.constant 0 : index
    %c0_11 = arith.constant 0 : index
    %32 = vector.load %arg6[%c0_10, %c0_11] : memref<256x256xf32, #tpu.memory_space<vmem>>, vector<256x256xf32>
    %c0_12 = arith.constant 0 : index
    %c0_13 = arith.constant 0 : index
    %33 = vector.load %arg7[%c0_12, %c0_13] : memref<256x1xf32, #tpu.memory_space<vmem>>, vector<256x1xf32>
    %cst = arith.constant dense<0.000000e+00> : vector<256x1xf32>
    %34 = tpu.matmul %32, %33, %cst {dimension_numbers = #tpu.dot_dimension_numbers<[1], [0], [0], [1], [0, 0, 1, 1], [], []>} : vector<256x256xf32>, vector<256x1xf32>, vector<256x1xf32> -> vector<256x1xf32>
    %c0_14 = arith.constant 0 : index
    %c0_15 = arith.constant 0 : index
    %35 = vector.load %arg5[%c0_14, %c0_15] : memref<256x1xf32, #tpu.memory_space<vmem>>, vector<256x1xf32>
    %36 = arith.subf %34, %35 : vector<256x1xf32>
    %c0_16 = arith.constant 0 : index
    %c0_17 = arith.constant 0 : index
    %37 = vector.load %arg10[%c0_16, %c0_17] : memref<256x1xf32, #tpu.memory_space<vmem>>, vector<256x1xf32>
    %38 = arith.mulf %36, %36 : vector<256x1xf32>
    %39 = arith.addf %37, %38 : vector<256x1xf32>
    %c0_18 = arith.constant 0 : index
    %c0_19 = arith.constant 0 : index
    %40 = vector.load %arg10[%c0_18, %c0_19] : memref<256x1xf32, #tpu.memory_space<vmem>>, vector<256x1xf32>
    tpu.vector_store %arg10[%c0_18, %c0_19], %39 {strides = array<i32>} : memref<256x1xf32, #tpu.memory_space<vmem>>, vector<256x1xf32>,
    %c0_i32_20 = arith.constant 0 : i32
    %41 = arith.cmpi eq, %arg0, %c0_i32_20 : i32
    %42 = arith.extui %41 : i1 to i32
    %c0_i32_21 = arith.constant 0 : i32
    %43 = arith.cmpi ne, %42, %c0_i32_21 : i32
    scf.if %43 {
      %c0_22 = arith.constant 0 : index
      %44 = memref.load %arg1[%c0_22] : memref<4xf32, #tpu.memory_space<smem>>
      %c3 = arith.constant 3 : index
      %45 = memref.load %arg1[%c3] : memref<4xf32, #tpu.memory_space<smem>>
      %c0_23 = arith.constant 0 : index
      %c0_24 = arith.constant 0 : index
      %46 = vector.load %arg9[%c0_23, %c0_24] : memref<1x256xf32, #tpu.memory_space<vmem>>, vector<1x256xf32>
      %47 = vector.shape_cast %46 : vector<1x256xf32> to vector<1x1x256xf32>
      %cst_25 = arith.constant dense<0.000000e+00> : vector<1xf32>
      %48 = vector.multi_reduction <add>, %47, %cst_25 [1, 2] : vector<1x1x256xf32> to vector<1xf32>
      %49 = vector.shape_cast %48 : vector<1xf32> to vector<1x1x1xf32>
      %50 = vector.extract %49[0, 0, 0] : f32 from vector<1x1x1xf32>
      %51 = arith.mulf %44, %45 : f32
      %c0_26 = arith.constant 0 : index
      %c0_27 = arith.constant 0 : index
      %52 = vector.load %arg10[%c0_26, %c0_27] : memref<256x1xf32, #tpu.memory_space<vmem>>, vector<256x1xf32>
      %53 = vector.shape_cast %52 : vector<256x1xf32> to vector<1x256x1xf32>
      %cst_28 = arith.constant dense<0.000000e+00> : vector<1xf32>
      %54 = vector.multi_reduction <add>, %53, %cst_28 [1, 2] : vector<1x256x1xf32> to vector<1xf32>
      %55 = vector.shape_cast %54 : vector<1xf32> to vector<1x1x1xf32>
      %56 = vector.extract %55[0, 0, 0] : f32 from vector<1x1x1xf32>
      %57 = arith.mulf %51, %56 : f32
      %58 = arith.addf %50, %57 : f32
      %c0_29 = arith.constant 0 : index
      %c0_30 = arith.constant 0 : index
      %59 = memref.load %arg8[%c0_29, %c0_30] : memref<1x1xf32, #tpu.memory_space<smem>>
      memref.store %58, %arg8[%c0_29, %c0_30] : memref<1x1xf32, #tpu.memory_space<smem>>
    } else {
    }
    return
  }
  func.func @transform_0(%arg0: i32) -> i32 {
    %c0_i32 = arith.constant 0 : i32
    %c0_i32_0 = arith.constant 0 : i32
    return %c0_i32 : i32
  }
  func.func @transform_1(%arg0: i32) -> i32 {
    %c0_i32 = arith.constant 0 : i32
    %c0_i32_0 = arith.constant 0 : i32
    return %c0_i32 : i32
  }
  func.func @transform_2(%arg0: i32) -> (i32, i32) {
    %c0_i32 = arith.constant 0 : i32
    %c0_i32_0 = arith.constant 0 : i32
    return %c0_i32, %arg0 : i32, i32
  }
  func.func @transform_3(%arg0: i32) -> (i32, i32) {
    %c0_i32 = arith.constant 0 : i32
    %c0_i32_0 = arith.constant 0 : i32
    return %c0_i32, %arg0 : i32, i32
  }
  func.func @transform_4(%arg0: i32) -> (i32, i32) {
    %c0_i32 = arith.constant 0 : i32
    %c0_i32_0 = arith.constant 0 : i32
    return %arg0, %c0_i32 : i32, i32
  }
  func.func @transform_5(%arg0: i32) -> (i32, i32) {
    %c0_i32 = arith.constant 0 : i32
    %c0_i32_0 = arith.constant 0 : i32
    return %arg0, %c0_i32 : i32, i32
  }
  func.func @transform_6(%arg0: i32) -> (i32, i32) {
    %c0_i32 = arith.constant 0 : i32
    %c0_i32_0 = arith.constant 0 : i32
    %c0_i32_1 = arith.constant 0 : i32
    return %c0_i32, %c0_i32_0 : i32, i32
  }
  func.func @transform_7(%arg0: i32) -> (i32, i32) {
    %c0_i32 = arith.constant 0 : i32
    %c0_i32_0 = arith.constant 0 : i32
    %c0_i32_1 = arith.constant 0 : i32
    return %c0_i32, %c0_i32_0 : i32, i32
  }
}

</mosaic_0001>

<llo_original>
// kernel: tpu_custom_call.1
$region0: #{tpu_custom_call.1}
  #allocation0 [shape = 'u32[]', space=smem, size = 0x4, offset = 0x4, fixed_abs, tag = 'smem constant byte address 0x4 - core index']
  #allocation1 [shape = 'u32[144,128]{1,0:T(1,128)}', space=vmem, size = 0x12000, scoped, tag = 'internal scratch']
  #allocation2 [shape = 'f32[1,256]{1,0:T(1,128)}', space=vmem, size = 0x400, scoped, tag = 'scratch operand']
  #allocation3 [shape = 'f32[256,1]{1,0:T(8,128)}', space=vmem, size = 0x20000, scoped, tag = 'scratch operand']
  %s0 = inlined_call_operand.vmem [shape: f32[4], index: 0, kind: input, shape index: {}]
  %s1 = inlined_call_operand.vmem [shape: s32[2], index: 1, kind: input, shape index: {}]
  %s2 = inlined_call_operand.vmem [shape: f32[1,256], index: 2, kind: input, shape index: {}]
  %s3 = inlined_call_operand.vmem [shape: f32[1,256], index: 3, kind: input, shape index: {}]
  %s4 = inlined_call_operand.vmem [shape: f32[256,1], index: 4, kind: input, shape index: {}]
  %s5 = inlined_call_operand.vmem [shape: f32[256,256], index: 5, kind: input, shape index: {}]
  %s6 = inlined_call_operand.vmem [shape: f32[256,1], index: 6, kind: input, shape index: {}]
  %s7 = inlined_call_operand.hbm [shape: f32[1,1], index: 7, kind: output, shape index: {}]
  %s8 = sld [smem:[#allocation0]]
  $region54: #{tpu_custom_call.1} parent=0
    _
  %s10 = ssub.s32 1, %s8
  %s11 = scalar_select 0, %s10, %s8
  $region1: #{tpu_custom_call.1} parent=0
    #allocation4 [shape = 'u8[512]{0}', space=smem, size = 0x200, scoped, tag = 'input window, operand 0, single buffered']
    #allocation5 [shape = 's32[1]{0}', space=sflag, size = 0x4, scoped, tag = 'scoped memory for tpu_custom_call.1']
    #allocation6 [shape = 's32[1]{0}', space=sflag, size = 0x4, scoped, tag = 'scoped memory for tpu_custom_call.1']
    #allocation7 [shape = 'u8[512]{0}', space=smem, size = 0x200, scoped, tag = 'input window, operand 1, single buffered']
    #allocation8 [shape = 's32[1]{0}', space=sflag, size = 0x4, scoped, tag = 'scoped memory for tpu_custom_call.1']
    #allocation9 [shape = 'u8[512]{0}', space=smem, size = 0x200, scoped, tag = 'output window, operand 0, single buffered']
    %12 = vsyncpa [#allocation6], 0
    %13 = vsyncpa [#allocation8], 0
    %14 = vsyncpa [#allocation5], 0
    // Predicated region
    $region2: #{tpu_custom_call.1} parent=1 // pred_check
      _
    $region3: #{tpu_custom_call.1} parent=1 // pred_check_branch
      %16 = sbr.rel (0) target = $region5
    $region4: #{tpu_custom_call.1} parent=1 // pred_region
      %s18 = ssub.s32 16, 16
      %19 = vsyncadd [#allocation6], %s18
      %s21 = sshll.u32 %s0, 4
      %s22 = int_to_ptr.vmem [resolvable:$true] %s21
      %24 = dma.vmem_to_smem %s22, 16, [#allocation4], [#allocation6]
    $region5: #{tpu_custom_call.1} parent=1 // pred_fallthru
      _
    // Predicated region
    $region6: #{tpu_custom_call.1} parent=1 // pred_check
      _
    $region7: #{tpu_custom_call.1} parent=1 // pred_check_branch
      %26 = sbr.rel (0) target = $region9
    $region8: #{tpu_custom_call.1} parent=1 // pred_region
      %s28 = ssub.s32 16, 16
      %29 = vsyncadd [#allocation8], %s28
      %s31 = sshll.u32 %s1, 4
      %s32 = int_to_ptr.vmem [resolvable:$true] %s31
      %34 = dma.vmem_to_smem %s32, 16, [#allocation7], [#allocation8]
    $region9: #{tpu_custom_call.1} parent=1 // pred_fallthru
      _
    // Predicated region
    $region10: #{tpu_custom_call.1} parent=1 // pred_check
      _
    $region11: #{tpu_custom_call.1} parent=1 // pred_check_branch
      %36 = sbr.rel (0) target = $region13
    $region12: #{tpu_custom_call.1} parent=1 // pred_region
      _
    $region13: #{tpu_custom_call.1} parent=1 // pred_fallthru
      _
    // Predicated region
    $region14: #{tpu_custom_call.1} parent=1 // pred_check
      _
    $region15: #{tpu_custom_call.1} parent=1 // pred_check_branch
      %38 = sbr.rel (0) target = $region17
    $region16: #{tpu_custom_call.1} parent=1 // pred_region
      _
    $region17: #{tpu_custom_call.1} parent=1 // pred_fallthru
      _
    // Predicated region
    $region18: #{tpu_custom_call.1} parent=1 // pred_check
      _
    $region19: #{tpu_custom_call.1} parent=1 // pred_check_branch
      %40 = sbr.rel (0) target = $region21
    $region20: #{tpu_custom_call.1} parent=1 // pred_region
      _
    $region21: #{tpu_custom_call.1} parent=1 // pred_fallthru
      _
    // Predicated region
    $region22: #{tpu_custom_call.1} parent=1 // pred_check
      _
    $region23: #{tpu_custom_call.1} parent=1 // pred_check_branch
      %42 = sbr.rel (0) target = $region25
    $region24: #{tpu_custom_call.1} parent=1 // pred_region
      _
    $region25: #{tpu_custom_call.1} parent=1 // pred_fallthru
      _
    // Predicated region
    $region26: #{tpu_custom_call.1} parent=1 // pred_check
      _
    $region27: #{tpu_custom_call.1} parent=1 // pred_check_branch
      %44 = sbr.rel (0) target = $region29
    $region28: #{tpu_custom_call.1} parent=1 // pred_region
      _
    $region29: #{tpu_custom_call.1} parent=1 // pred_fallthru
      _
    // Predicated region
    $region30: #{tpu_custom_call.1} parent=1 // pred_check
      _
    $region31: #{tpu_custom_call.1} parent=1 // pred_check_branch
      %46 = sbr.rel (0) target = $region33
    $region32: #{tpu_custom_call.1} parent=1 // pred_region
      %47 = dma.done [#allocation6], 16
    $region33: #{tpu_custom_call.1} parent=1 // pred_fallthru
      _
    // Predicated region
    $region34: #{tpu_custom_call.1} parent=1 // pred_check
      _
    $region35: #{tpu_custom_call.1} parent=1 // pred_check_branch
      %49 = sbr.rel (0) target = $region37
    $region36: #{tpu_custom_call.1} parent=1 // pred_region
      %50 = dma.done [#allocation8], 16
    $region37: #{tpu_custom_call.1} parent=1 // pred_fallthru
      _
    %51 = sfence
    %p52 = scmp.eq.s32.totalorder 0, 0
    // Predicated region
    $region38: #{tpu_custom_call.1} parent=1 // pred_check
      %p53 = pneg %p52
    $region39: #{tpu_custom_call.1} parent=1 // pred_check_branch
      %55 = sbr.rel (%p53) target = $region41
    $region40: #{tpu_custom_call.1} parent=1 // pred_region
      %v56 = vlaneseq
      %vm57 = vcmp.ge.s32.totalorder %v56, 0
      %vm58 = vcmp.lt.s32.totalorder %v56, 256
      %vm59 = vmand %vm57, %vm58
      %60 = vst.msk [vmem:[#allocation2] sm:$0x3] %vm59, 0.0
      %vm61 = vcmask 7168
      %62 = vst.msk [vmem:[#allocation3] sm:$0xff] %vm61, 0.0
      %63 = vst.msk [vmem:[#allocation3 + $0x8] sm:$0xff] %vm61, 0.0
      %64 = vst.msk [vmem:[#allocation3 + $0x10] sm:$0xff] %vm61, 0.0
      %65 = vst.msk [vmem:[#allocation3 + $0x18] sm:$0xff] %vm61, 0.0
      %66 = vst.msk [vmem:[#allocation3 + $0x20] sm:$0xff] %vm61, 0.0
      %67 = vst.msk [vmem:[#allocation3 + $0x28] sm:$0xff] %vm61, 0.0
      %68 = vst.msk [vmem:[#allocation3 + $0x30] sm:$0xff] %vm61, 0.0
      %69 = vst.msk [vmem:[#allocation3 + $0x38] sm:$0xff] %vm61, 0.0
      %70 = vst.msk [vmem:[#allocation3 + $0x40] sm:$0xff] %vm61, 0.0
      %71 = vst.msk [vmem:[#allocation3 + $0x48] sm:$0xff] %vm61, 0.0
      %72 = vst.msk [vmem:[#allocation3 + $0x50] sm:$0xff] %vm61, 0.0
      %73 = vst.msk [vmem:[#allocation3 + $0x58] sm:$0xff] %vm61, 0.0
      %74 = vst.msk [vmem:[#allocation3 + $0x60] sm:$0xff] %vm61, 0.0
      %75 = vst.msk [vmem:[#allocation3 + $0x68] sm:$0xff] %vm61, 0.0
      %76 = vst.msk [vmem:[#allocation3 + $0x70] sm:$0xff] %vm61, 0.0
      %77 = vst.msk [vmem:[#allocation3 + $0x78] sm:$0xff] %vm61, 0.0
      %78 = vst.msk [vmem:[#allocation3 + $0x80] sm:$0xff] %vm61, 0.0
      %79 = vst.msk [vmem:[#allocation3 + $0x88] sm:$0xff] %vm61, 0.0
      %80 = vst.msk [vmem:[#allocation3 + $0x90] sm:$0xff] %vm61, 0.0
      %81 = vst.msk [vmem:[#allocation3 + $0x98] sm:$0xff] %vm61, 0.0
      %82 = vst.msk [vmem:[#allocation3 + $0xa0] sm:$0xff] %vm61, 0.0
      %83 = vst.msk [vmem:[#allocation3 + $0xa8] sm:$0xff] %vm61, 0.0
      %84 = vst.msk [vmem:[#allocation3 + $0xb0] sm:$0xff] %vm61, 0.0
      %85 = vst.msk [vmem:[#allocation3 + $0xb8] sm:$0xff] %vm61, 0.0
      %86 = vst.msk [vmem:[#allocation3 + $0xc0] sm:$0xff] %vm61, 0.0
      %87 = vst.msk [vmem:[#allocation3 + $0xc8] sm:$0xff] %vm61, 0.0
      %88 = vst.msk [vmem:[#allocation3 + $0xd0] sm:$0xff] %vm61, 0.0
      %89 = vst.msk [vmem:[#allocation3 + $0xd8] sm:$0xff] %vm61, 0.0
      %90 = vst.msk [vmem:[#allocation3 + $0xe0] sm:$0xff] %vm61, 0.0
      %91 = vst.msk [vmem:[#allocation3 + $0xe8] sm:$0xff] %vm61, 0.0
      %92 = vst.msk [vmem:[#allocation3 + $0xf0] sm:$0xff] %vm61, 0.0
      %93 = vst.msk [vmem:[#allocation3 + $0xf8] sm:$0xff] %vm61, 0.0
    $region41: #{tpu_custom_call.1} parent=1 // pred_fallthru
      _
    %v94 = vld [vmem:[%s2] sm:$0x3]
    %v95 = vld [vmem:[%s3] sm:$0x3]
    %v96 = vsub.f32 %v94, %v95
    %v97 = vmul.f32 %v96, %v96
    %s98 = smul.u32 0, 256
    %v99 = vlaneseq
    %v100 = vand.u32 %v99, 127
    %v101 = vadd.s32 %v100, 128
    %v102 = vstv %s98
    %v103 = vadd.s32 %v102, %v100
    %v104 = vadd.s32 %v102, %v101
    %s105 = sld [smem:[#allocation7]]
    %v106 = vstv %s105
    %vm107 = vcmp.lt.s32.totalorder %v103, %v106
    %vm108 = vcmp.lt.s32.totalorder %v104, %v106
    %v109 = vsel %vm107, 1, 0
    %v110 = vsel %vm108, 1, 0
    %v111 = vcvt.s32.f32 %v109
    %v112 = vcvt.s32.f32 %v110
    %s113 = sld [smem:[#allocation4 + $0x1]]
    %v114 = vstv %s113
    %v115 = vmul.f32 %v111, %v114
    %v116 = vmul.f32 %v112, %v114
    %s117 = sld [smem:[#allocation7 + $0x1]]
    %v118 = vstv %s117
    %vm119 = vcmp.ge.s32.totalorder %v103, %v118
    %vm120 = vcmp.ge.s32.totalorder %v104, %v118
    %v121 = vsel %vm119, 1, 0
    %v122 = vsel %vm120, 1, 0
    %v123 = vcvt.s32.f32 %v121
    %v124 = vcvt.s32.f32 %v122
    %s125 = sld [smem:[#allocation4 + $0x2]]
    %v126 = vstv %s125
    %v127 = vmul.f32 %v123, %v126
    %v128 = vmul.f32 %v124, %v126
    %v129 = vld [vmem:[#allocation2] sm:$0x3]
    %v130 = vadd.f32 %v115, %v127
    %v131 = vadd.f32 %v116, %v128
    %v133 = vlaneseq
    %v134 = vshrl.u32 %v133, 7
    %v135 = vsub.s32 0, %v134
    %v136 = vrot.slane %v97, %v135
    %v137 = vlaneseq
    %v138 = vshrl.u32 %v137, 7
    %v139 = vsub.s32 1, %v138
    %v140 = vrot.slane %v97, %v139
    %v143 = vmul.f32 %v130, %v136
    %v144 = vmul.f32 %v131, %v140
    %v147 = vcombine.low %v143, %v144
    %v149 = vunpack.c.l.s4 1966171168
    %v150 = vunpack.c.0.s8 %v149
    %v151 = vlaneseq
    %v152 = vshrl.u32 %v151, 7
    %v153 = vsub.s32 %v150, %v152
    %v154 = vrot.slane %v147, %v153
    %v156 = vunpack.c.l.s4 1966171168
    %v157 = vunpack.c.0.s8 %v156
    %v158 = vlaneseq
    %v159 = vshrl.u32 %v158, 7
    %v160 = vsub.s32 %v157, %v159
    %v161 = vrot.slane %v154, %v160
    %v163 = vadd.f32 %v129, %v161
    %v164 = vlaneseq
    %vm165 = vcmp.ge.s32.totalorder %v164, 0
    %vm166 = vcmp.lt.s32.totalorder %v164, 256
    %vm167 = vmand %vm165, %vm166
    %168 = vst.msk [vmem:[#allocation2] sm:$0x3] %vm167, %v163
    %v169 = vld [vmem:[%s5] sm:$0xff]
    %v170 = vld [vmem:[%s5 + $0x8] sm:$0xff]
    %v171 = vld [vmem:[%s5 + $0x10] sm:$0xff]
    %v172 = vld [vmem:[%s5 + $0x18] sm:$0xff]
    %v173 = vld [vmem:[%s5 + $0x20] sm:$0xff]
    %v174 = vld [vmem:[%s5 + $0x28] sm:$0xff]
    %v175 = vld [vmem:[%s5 + $0x30] sm:$0xff]
    %v176 = vld [vmem:[%s5 + $0x38] sm:$0xff]
    %v177 = vld [vmem:[%s5 + $0x40] sm:$0xff]
    %v178 = vld [vmem:[%s5 + $0x48] sm:$0xff]
    %v179 = vld [vmem:[%s5 + $0x50] sm:$0xff]
    %v180 = vld [vmem:[%s5 + $0x58] sm:$0xff]
    %v181 = vld [vmem:[%s5 + $0x60] sm:$0xff]
    %v182 = vld [vmem:[%s5 + $0x68] sm:$0xff]
    %v183 = vld [vmem:[%s5 + $0x70] sm:$0xff]
    %v184 = vld [vmem:[%s5 + $0x78] sm:$0xff]
    %v185 = vld [vmem:[%s5 + $0x80] sm:$0xff]
    %v186 = vld [vmem:[%s5 + $0x88] sm:$0xff]
    %v187 = vld [vmem:[%s5 + $0x90] sm:$0xff]
    %v188 = vld [vmem:[%s5 + $0x98] sm:$0xff]
    %v189 = vld [vmem:[%s5 + $0xa0] sm:$0xff]
    %v190 = vld [vmem:[%s5 + $0xa8] sm:$0xff]
    %v191 = vld [vmem:[%s5 + $0xb0] sm:$0xff]
    %v192 = vld [vmem:[%s5 + $0xb8] sm:$0xff]
    %v193 = vld [vmem:[%s5 + $0xc0] sm:$0xff]
    %v194 = vld [vmem:[%s5 + $0xc8] sm:$0xff]
    %v195 = vld [vmem:[%s5 + $0xd0] sm:$0xff]
    %v196 = vld [vmem:[%s5 + $0xd8] sm:$0xff]
    %v197 = vld [vmem:[%s5 + $0xe0] sm:$0xff]
    %v198 = vld [vmem:[%s5 + $0xe8] sm:$0xff]
    %v199 = vld [vmem:[%s5 + $0xf0] sm:$0xff]
    %v200 = vld [vmem:[%s5 + $0xf8] sm:$0xff]
    %v201 = vld [vmem:[%s5 + $0x100] sm:$0xff]
    %v202 = vld [vmem:[%s5 + $0x108] sm:$0xff]
    %v203 = vld [vmem:[%s5 + $0x110] sm:$0xff]
    %v204 = vld [vmem:[%s5 + $0x118] sm:$0xff]
    %v205 = vld [vmem:[%s5 + $0x120] sm:$0xff]
    %v206 = vld [vmem:[%s5 + $0x128] sm:$0xff]
    %v207 = vld [vmem:[%s5 + $0x130] sm:$0xff]
    %v208 = vld [vmem:[%s5 + $0x138] sm:$0xff]
    %v209 = vld [vmem:[%s5 + $0x140] sm:$0xff]
    %v210 = vld [vmem:[%s5 + $0x148] sm:$0xff]
    %v211 = vld [vmem:[%s5 + $0x150] sm:$0xff]
    %v212 = vld [vmem:[%s5 + $0x158] sm:$0xff]
    %v213 = vld [vmem:[%s5 + $0x160] sm:$0xff]
    %v214 = vld [vmem:[%s5 + $0x168] sm:$0xff]
    %v215 = vld [vmem:[%s5 + $0x170] sm:$0xff]
    %v216 = vld [vmem:[%s5 + $0x178] sm:$0xff]
    %v217 = vld [vmem:[%s5 + $0x180] sm:$0xff]
    %v218 = vld [vmem:[%s5 + $0x188] sm:$0xff]
    %v219 = vld [vmem:[%s5 + $0x190] sm:$0xff]
    %v220 = vld [vmem:[%s5 + $0x198] sm:$0xff]
    %v221 = vld [vmem:[%s5 + $0x1a0] sm:$0xff]
    %v222 = vld [vmem:[%s5 + $0x1a8] sm:$0xff]
    %v223 = vld [vmem:[%s5 + $0x1b0] sm:$0xff]
    %v224 = vld [vmem:[%s5 + $0x1b8] sm:$0xff]
    %v225 = vld [vmem:[%s5 + $0x1c0] sm:$0xff]
    %v226 = vld [vmem:[%s5 + $0x1c8] sm:$0xff]
    %v227 = vld [vmem:[%s5 + $0x1d0] sm:$0xff]
    %v228 = vld [vmem:[%s5 + $0x1d8] sm:$0xff]
    %v229 = vld [vmem:[%s5 + $0x1e0] sm:$0xff]
    %v230 = vld [vmem:[%s5 + $0x1e8] sm:$0xff]
    %v231 = vld [vmem:[%s5 + $0x1f0] sm:$0xff]
    %v232 = vld [vmem:[%s5 + $0x1f8] sm:$0xff]
    %v233 = vld [vmem:[%s6] sm:$0xff]
    %v234 = vld [vmem:[%s6 + $0x8] sm:$0xff]
    %v235 = vld [vmem:[%s6 + $0x10] sm:$0xff]
    %v236 = vld [vmem:[%s6 + $0x18] sm:$0xff]
    %v237 = vld [vmem:[%s6 + $0x20] sm:$0xff]
    %v238 = vld [vmem:[%s6 + $0x28] sm:$0xff]
    %v239 = vld [vmem:[%s6 + $0x30] sm:$0xff]
    %v240 = vld [vmem:[%s6 + $0x38] sm:$0xff]
    %v241 = vld [vmem:[%s6 + $0x40] sm:$0xff]
    %v242 = vld [vmem:[%s6 + $0x48] sm:$0xff]
    %v243 = vld [vmem:[%s6 + $0x50] sm:$0xff]
    %v244 = vld [vmem:[%s6 + $0x58] sm:$0xff]
    %v245 = vld [vmem:[%s6 + $0x60] sm:$0xff]
    %v246 = vld [vmem:[%s6 + $0x68] sm:$0xff]
    %v247 = vld [vmem:[%s6 + $0x70] sm:$0xff]
    %v248 = vld [vmem:[%s6 + $0x78] sm:$0xff]
    %v249 = vld [vmem:[%s6 + $0x80] sm:$0xff]
    %v250 = vld [vmem:[%s6 + $0x88] sm:$0xff]
    %v251 = vld [vmem:[%s6 + $0x90] sm:$0xff]
    %v252 = vld [vmem:[%s6 + $0x98] sm:$0xff]
    %v253 = vld [vmem:[%s6 + $0xa0] sm:$0xff]
    %v254 = vld [vmem:[%s6 + $0xa8] sm:$0xff]
    %v255 = vld [vmem:[%s6 + $0xb0] sm:$0xff]
    %v256 = vld [vmem:[%s6 + $0xb8] sm:$0xff]
    %v257 = vld [vmem:[%s6 + $0xc0] sm:$0xff]
    %v258 = vld [vmem:[%s6 + $0xc8] sm:$0xff]
    %v259 = vld [vmem:[%s6 + $0xd0] sm:$0xff]
    %v260 = vld [vmem:[%s6 + $0xd8] sm:$0xff]
    %v261 = vld [vmem:[%s6 + $0xe0] sm:$0xff]
    %v262 = vld [vmem:[%s6 + $0xe8] sm:$0xff]
    %v263 = vld [vmem:[%s6 + $0xf0] sm:$0xff]
    %v264 = vld [vmem:[%s6 + $0xf8] sm:$0xff]
    %265 = vmatprep.subr.mxu0 0.0
    %266 = vmatpush1.msra.mxu0 %v233
    %267 = vmatprep.subr.mxu0 0.0
    %268 = vmatpush1.msra.mxu0 %v234
    %269 = vmatprep.subr.mxu0 0.0
    %270 = vmatpush1.msra.mxu0 %v235
    %271 = vmatprep.subr.mxu0 0.0
    %272 = vmatpush1.msra.mxu0 %v236
    %273 = vmatprep.subr.mxu0 0.0
    %274 = vmatpush1.msra.mxu0 %v237
    %275 = vmatprep.subr.mxu0 0.0
    %276 = vmatpush1.msra.mxu0 %v238
    %277 = vmatprep.subr.mxu0 0.0
    %278 = vmatpush1.msra.mxu0 %v239
    %279 = vmatprep.subr.mxu0 0.0
    %280 = vmatpush1.msra.mxu0 %v240
    %281 = vmatprep.subr.mxu0 0.0
    %282 = vmatpush1.msra.mxu0 %v241
    %283 = vmatprep.subr.mxu0 0.0
    %284 = vmatpush1.msra.mxu0 %v242
    %285 = vmatprep.subr.mxu0 0.0
    %286 = vmatpush1.msra.mxu0 %v243
    %287 = vmatprep.subr.mxu0 0.0
    %288 = vmatpush1.msra.mxu0 %v244
    %289 = vmatprep.subr.mxu0 0.0
    %290 = vmatpush1.msra.mxu0 %v245
    %291 = vmatprep.subr.mxu0 0.0
    %292 = vmatpush1.msra.mxu0 %v246
    %293 = vmatprep.subr.mxu0 0.0
    %294 = vmatpush1.msra.mxu0 %v247
    %295 = vmatprep.subr.mxu0 0.0
    %296 = vmatpush1.msra.mxu0 %v248
    %297 = vmatprep.subr.mxu0 0.0
    %298 = vmatpush1.msra.mxu0 %v249
    %299 = vmatprep.subr.mxu0 0.0
    %300 = vmatpush1.msra.mxu0 %v250
    %301 = vmatprep.subr.mxu0 0.0
    %302 = vmatpush1.msra.mxu0 %v251
    %303 = vmatprep.subr.mxu0 0.0
    %304 = vmatpush1.msra.mxu0 %v252
    %305 = vmatprep.subr.mxu0 0.0
    %306 = vmatpush1.msra.mxu0 %v253
    %307 = vmatprep.subr.mxu0 0.0
    %308 = vmatpush1.msra.mxu0 %v254
    %309 = vmatprep.subr.mxu0 0.0
    %310 = vmatpush1.msra.mxu0 %v255
    %311 = vmatprep.subr.mxu0 0.0
    %312 = vmatpush1.msra.mxu0 %v256
    %313 = vmatprep.subr.mxu0 0.0
    %314 = vmatpush1.msra.mxu0 %v257
    %315 = vmatprep.subr.mxu0 0.0
    %316 = vmatpush1.msra.mxu0 %v258
    %317 = vmatprep.subr.mxu0 0.0
    %318 = vmatpush1.msra.mxu0 %v259
    %319 = vmatprep.subr.mxu0 0.0
    %320 = vmatpush1.msra.mxu0 %v260
    %321 = vmatprep.subr.mxu0 0.0
    %322 = vmatpush1.msra.mxu0 %v261
    %323 = vmatprep.subr.mxu0 0.0
    %324 = vmatpush1.msra.mxu0 %v262
    %325 = vmatprep.subr.mxu0 0.0
    %326 = vmatpush1.msra.mxu0 %v263
    %327 = vmatprep.subr.mxu0 0.0
    %328 = vmatpush1.msra.mxu0 %v264
    %329 = vmatprep.mubr.f32.mxu0 %v170
    %330 = vmatmul.mubr.f32.gmra.mrb[0].mxu0 %v169
    %v331 = vpop.f32.mrb[0].mxu0
    %v332 = vadd.f32 0.0, %v331
    %v333 = vpop.f32.mrb[0].mxu0
    %334 = vmatprep.mubr.f32.mxu0 %v172
    %335 = vmatmul.mubr.f32.gmra.mrb[0].mxu0 %v171
    %v336 = vpop.f32.mrb[0].mxu0
    %v337 = vadd.f32 0.0, %v336
    %v338 = vpop.f32.mrb[0].mxu0
    %339 = vmatprep.mubr.f32.mxu0 %v174
    %340 = vmatmul.mubr.f32.gmra.mrb[0].mxu0 %v173
    %v341 = vpop.f32.mrb[0].mxu0
    %v342 = vadd.f32 0.0, %v341
    %v343 = vpop.f32.mrb[0].mxu0
    %344 = vmatprep.mubr.f32.mxu0 %v176
    %345 = vmatmul.mubr.f32.gmra.mrb[0].mxu0 %v175
    %v346 = vpop.f32.mrb[0].mxu0
    %v347 = vadd.f32 0.0, %v346
    %v348 = vpop.f32.mrb[0].mxu0
    %349 = vmatprep.mubr.f32.mxu0 %v178
    %350 = vmatmul.mubr.f32.gmra.mrb[0].mxu0 %v177
    %v351 = vpop.f32.mrb[0].mxu0
    %v352 = vadd.f32 0.0, %v351
    %v353 = vpop.f32.mrb[0].mxu0
    %354 = vmatprep.mubr.f32.mxu0 %v180
    %355 = vmatmul.mubr.f32.gmra.mrb[0].mxu0 %v179
    %v356 = vpop.f32.mrb[0].mxu0
    %v357 = vadd.f32 0.0, %v356
    %v358 = vpop.f32.mrb[0].mxu0
    %359 = vmatprep.mubr.f32.mxu0 %v182
    %360 = vmatmul.mubr.f32.gmra.mrb[0].mxu0 %v181
    %v361 = vpop.f32.mrb[0].mxu0
    %v362 = vadd.f32 0.0, %v361
    %v363 = vpop.f32.mrb[0].mxu0
    %364 = vmatprep.mubr.f32.mxu0 %v184
    %365 = vmatmul.mubr.f32.gmra.mrb[0].mxu0 %v183
    %v366 = vpop.f32.mrb[0].mxu0
    %v367 = vadd.f32 0.0, %v366
    %v368 = vpop.f32.mrb[0].mxu0
    %369 = vmatprep.mubr.f32.mxu0 %v186
    %370 = vmatmul.mubr.f32.gmra.mrb[0].mxu0 %v185
    %v371 = vpop.f32.mrb[0].mxu0
    %v372 = vadd.f32 0.0, %v371
    %v373 = vpop.f32.mrb[0].mxu0
    %374 = vmatprep.mubr.f32.mxu0 %v188
    %375 = vmatmul.mubr.f32.gmra.mrb[0].mxu0 %v187
    %v376 = vpop.f32.mrb[0].mxu0
    %v377 = vadd.f32 0.0, %v376
    %v378 = vpop.f32.mrb[0].mxu0
    %379 = vmatprep.mubr.f32.mxu0 %v190
    %380 = vmatmul.mubr.f32.gmra.mrb[0].mxu0 %v189
    %v381 = vpop.f32.mrb[0].mxu0
    %v382 = vadd.f32 0.0, %v381
    %v383 = vpop.f32.mrb[0].mxu0
    %384 = vmatprep.mubr.f32.mxu0 %v192
    %385 = vmatmul.mubr.f32.gmra.mrb[0].mxu0 %v191
    %v386 = vpop.f32.mrb[0].mxu0
    %v387 = vadd.f32 0.0, %v386
    %v388 = vpop.f32.mrb[0].mxu0
    %389 = vmatprep.mubr.f32.mxu0 %v194
    %390 = vmatmul.mubr.f32.gmra.mrb[0].mxu0 %v193
    %v391 = vpop.f32.mrb[0].mxu0
    %v392 = vadd.f32 0.0, %v391
    %v393 = vpop.f32.mrb[0].mxu0
    %394 = vmatprep.mubr.f32.mxu0 %v196
    %395 = vmatmul.mubr.f32.gmra.mrb[0].mxu0 %v195
    %v396 = vpop.f32.mrb[0].mxu0
    %v397 = vadd.f32 0.0, %v396
    %v398 = vpop.f32.mrb[0].mxu0
    %399 = vmatprep.mubr.f32.mxu0 %v198
    %400 = vmatmul.mubr.f32.gmra.mrb[0].mxu0 %v197
    %v401 = vpop.f32.mrb[0].mxu0
    %v402 = vadd.f32 0.0, %v401
    %v403 = vpop.f32.mrb[0].mxu0
    %404 = vmatprep.mubr.f32.mxu0 %v200
    %405 = vmatmul.mubr.f32.gmra.mrb[0].mxu0 %v199
    %v406 = vpop.f32.mrb[0].mxu0
    %v407 = vadd.f32 0.0, %v406
    %v408 = vpop.f32.mrb[0].mxu0
    %409 = vmatprep.mubr.f32.mxu0 %v202
    %410 = vmatmul.mubr.f32.gmra.mrb[0].mxu0 %v201
    %v411 = vpop.f32.mrb[0].mxu0
    %v412 = vadd.f32 0.0, %v411
    %v413 = vpop.f32.mrb[0].mxu0
    %414 = vmatprep.mubr.f32.mxu0 %v204
    %415 = vmatmul.mubr.f32.gmra.mrb[0].mxu0 %v203
    %v416 = vpop.f32.mrb[0].mxu0
    %v417 = vadd.f32 0.0, %v416
    %v418 = vpop.f32.mrb[0].mxu0
    %419 = vmatprep.mubr.f32.mxu0 %v206
    %420 = vmatmul.mubr.f32.gmra.mrb[0].mxu0 %v205
    %v421 = vpop.f32.mrb[0].mxu0
    %v422 = vadd.f32 0.0, %v421
    %v423 = vpop.f32.mrb[0].mxu0
    %424 = vmatprep.mubr.f32.mxu0 %v208
    %425 = vmatmul.mubr.f32.gmra.mrb[0].mxu0 %v207
    %v426 = vpop.f32.mrb[0].mxu0
    %v427 = vadd.f32 0.0, %v426
    %v428 = vpop.f32.mrb[0].mxu0
    %429 = vmatprep.mubr.f32.mxu0 %v210
    %430 = vmatmul.mubr.f32.gmra.mrb[0].mxu0 %v209
    %v431 = vpop.f32.mrb[0].mxu0
    %v432 = vadd.f32 0.0, %v431
    %v433 = vpop.f32.mrb[0].mxu0
    %434 = vmatprep.mubr.f32.mxu0 %v212
    %435 = vmatmul.mubr.f32.gmra.mrb[0].mxu0 %v211
    %v436 = vpop.f32.mrb[0].mxu0
    %v437 = vadd.f32 0.0, %v436
    %v438 = vpop.f32.mrb[0].mxu0
    %439 = vmatprep.mubr.f32.mxu0 %v214
    %440 = vmatmul.mubr.f32.gmra.mrb[0].mxu0 %v213
    %v441 = vpop.f32.mrb[0].mxu0
    %v442 = vadd.f32 0.0, %v441
    %v443 = vpop.f32.mrb[0].mxu0
    %444 = vmatprep.mubr.f32.mxu0 %v216
    %445 = vmatmul.mubr.f32.gmra.mrb[0].mxu0 %v215
    %v446 = vpop.f32.mrb[0].mxu0
    %v447 = vadd.f32 0.0, %v446
    %v448 = vpop.f32.mrb[0].mxu0
    %449 = vmatprep.mubr.f32.mxu0 %v218
    %450 = vmatmul.mubr.f32.gmra.mrb[0].mxu0 %v217
    %v451 = vpop.f32.mrb[0].mxu0
    %v452 = vadd.f32 0.0, %v451
    %v453 = vpop.f32.mrb[0].mxu0
    %454 = vmatprep.mubr.f32.mxu0 %v220
    %455 = vmatmul.mubr.f32.gmra.mrb[0].mxu0 %v219
    %v456 = vpop.f32.mrb[0].mxu0
    %v457 = vadd.f32 0.0, %v456
    %v458 = vpop.f32.mrb[0].mxu0
    %459 = vmatprep.mubr.f32.mxu0 %v222
    %460 = vmatmul.mubr.f32.gmra.mrb[0].mxu0 %v221
    %v461 = vpop.f32.mrb[0].mxu0
    %v462 = vadd.f32 0.0, %v461
    %v463 = vpop.f32.mrb[0].mxu0
    %464 = vmatprep.mubr.f32.mxu0 %v224
    %465 = vmatmul.mubr.f32.gmra.mrb[0].mxu0 %v223
    %v466 = vpop.f32.mrb[0].mxu0
    %v467 = vadd.f32 0.0, %v466
    %v468 = vpop.f32.mrb[0].mxu0
    %469 = vmatprep.mubr.f32.mxu0 %v226
    %470 = vmatmul.mubr.f32.gmra.mrb[0].mxu0 %v225
    %v471 = vpop.f32.mrb[0].mxu0
    %v472 = vadd.f32 0.0, %v471
    %v473 = vpop.f32.mrb[0].mxu0
    %474 = vmatprep.mubr.f32.mxu0 %v228
    %475 = vmatmul.mubr.f32.gmra.mrb[0].mxu0 %v227
    %v476 = vpop.f32.mrb[0].mxu0
    %v477 = vadd.f32 0.0, %v476
    %v478 = vpop.f32.mrb[0].mxu0
    %479 = vmatprep.mubr.f32.mxu0 %v230
    %480 = vmatmul.mubr.f32.gmra.mrb[0].mxu0 %v229
    %v481 = vpop.f32.mrb[0].mxu0
    %v482 = vadd.f32 0.0, %v481
    %v483 = vpop.f32.mrb[0].mxu0
    %484 = vmatprep.mubr.f32.mxu0 %v232
    %485 = vmatmul.mubr.f32.gmra.mrb[0].mxu0 %v231
    %v486 = vpop.f32.mrb[0].mxu0
    %v487 = vadd.f32 0.0, %v486
    %v488 = vpop.f32.mrb[0].mxu0
    %489 = vdwg.mxu0
    %v490 = vld [vmem:[%s4] sm:$0xff]
    %v491 = vld [vmem:[%s4 + $0x8] sm:$0xff]
    %v492 = vld [vmem:[%s4 + $0x10] sm:$0xff]
    %v493 = vld [vmem:[%s4 + $0x18] sm:$0xff]
    %v494 = vld [vmem:[%s4 + $0x20] sm:$0xff]
    %v495 = vld [vmem:[%s4 + $0x28] sm:$0xff]
    %v496 = vld [vmem:[%s4 + $0x30] sm:$0xff]
    %v497 = vld [vmem:[%s4 + $0x38] sm:$0xff]
    %v498 = vld [vmem:[%s4 + $0x40] sm:$0xff]
    %v499 = vld [vmem:[%s4 + $0x48] sm:$0xff]
    %v500 = vld [vmem:[%s4 + $0x50] sm:$0xff]
    %v501 = vld [vmem:[%s4 + $0x58] sm:$0xff]
    %v502 = vld [vmem:[%s4 + $0x60] sm:$0xff]
    %v503 = vld [vmem:[%s4 + $0x68] sm:$0xff]
    %v504 = vld [vmem:[%s4 + $0x70] sm:$0xff]
    %v505 = vld [vmem:[%s4 + $0x78] sm:$0xff]
    %v506 = vld [vmem:[%s4 + $0x80] sm:$0xff]
    %v507 = vld [vmem:[%s4 + $0x88] sm:$0xff]
    %v508 = vld [vmem:[%s4 + $0x90] sm:$0xff]
    %v509 = vld [vmem:[%s4 + $0x98] sm:$0xff]
    %v510 = vld [vmem:[%s4 + $0xa0] sm:$0xff]
    %v511 = vld [vmem:[%s4 + $0xa8] sm:$0xff]
    %v512 = vld [vmem:[%s4 + $0xb0] sm:$0xff]
    %v513 = vld [vmem:[%s4 + $0xb8] sm:$0xff]
    %v514 = vld [vmem:[%s4 + $0xc0] sm:$0xff]
    %v515 = vld [vmem:[%s4 + $0xc8] sm:$0xff]
    %v516 = vld [vmem:[%s4 + $0xd0] sm:$0xff]
    %v517 = vld [vmem:[%s4 + $0xd8] sm:$0xff]
    %v518 = vld [vmem:[%s4 + $0xe0] sm:$0xff]
    %v519 = vld [vmem:[%s4 + $0xe8] sm:$0xff]
    %v520 = vld [vmem:[%s4 + $0xf0] sm:$0xff]
    %v521 = vld [vmem:[%s4 + $0xf8] sm:$0xff]
    %v522 = vsub.f32 %v332, %v490
    %v523 = vsub.f32 %v337, %v491
    %v524 = vsub.f32 %v342, %v492
    %v525 = vsub.f32 %v347, %v493
    %v526 = vsub.f32 %v352, %v494
    %v527 = vsub.f32 %v357, %v495
    %v528 = vsub.f32 %v362, %v496
    %v529 = vsub.f32 %v367, %v497
    %v530 = vsub.f32 %v372, %v498
    %v531 = vsub.f32 %v377, %v499
    %v532 = vsub.f32 %v382, %v500
    %v533 = vsub.f32 %v387, %v501
    %v534 = vsub.f32 %v392, %v502
    %v535 = vsub.f32 %v397, %v503
    %v536 = vsub.f32 %v402, %v504
    %v537 = vsub.f32 %v407, %v505
    %v538 = vsub.f32 %v412, %v506
    %v539 = vsub.f32 %v417, %v507
    %v540 = vsub.f32 %v422, %v508
    %v541 = vsub.f32 %v427, %v509
    %v542 = vsub.f32 %v432, %v510
    %v543 = vsub.f32 %v437, %v511
    %v544 = vsub.f32 %v442, %v512
    %v545 = vsub.f32 %v447, %v513
    %v546 = vsub.f32 %v452, %v514
    %v547 = vsub.f32 %v457, %v515
    %v548 = vsub.f32 %v462, %v516
    %v549 = vsub.f32 %v467, %v517
    %v550 = vsub.f32 %v472, %v518
    %v551 = vsub.f32 %v477, %v519
    %v552 = vsub.f32 %v482, %v520
    %v553 = vsub.f32 %v487, %v521
    %v554 = vld [vmem:[#allocation3] sm:$0xff]
    %v555 = vld [vmem:[#allocation3 + $0x8] sm:$0xff]
    %v556 = vld [vmem:[#allocation3 + $0x10] sm:$0xff]
    %v557 = vld [vmem:[#allocation3 + $0x18] sm:$0xff]
    %v558 = vld [vmem:[#allocation3 + $0x20] sm:$0xff]
    %v559 = vld [vmem:[#allocation3 + $0x28] sm:$0xff]
    %v560 = vld [vmem:[#allocation3 + $0x30] sm:$0xff]
    %v561 = vld [vmem:[#allocation3 + $0x38] sm:$0xff]
    %v562 = vld [vmem:[#allocation3 + $0x40] sm:$0xff]
    %v563 = vld [vmem:[#allocation3 + $0x48] sm:$0xff]
    %v564 = vld [vmem:[#allocation3 + $0x50] sm:$0xff]
    %v565 = vld [vmem:[#allocation3 + $0x58] sm:$0xff]
    %v566 = vld [vmem:[#allocation3 + $0x60] sm:$0xff]
    %v567 = vld [vmem:[#allocation3 + $0x68] sm:$0xff]
    %v568 = vld [vmem:[#allocation3 + $0x70] sm:$0xff]
    %v569 = vld [vmem:[#allocation3 + $0x78] sm:$0xff]
    %v570 = vld [vmem:[#allocation3 + $0x80] sm:$0xff]
    %v571 = vld [vmem:[#allocation3 + $0x88] sm:$0xff]
    %v572 = vld [vmem:[#allocation3 + $0x90] sm:$0xff]
    %v573 = vld [vmem:[#allocation3 + $0x98] sm:$0xff]
    %v574 = vld [vmem:[#allocation3 + $0xa0] sm:$0xff]
    %v575 = vld [vmem:[#allocation3 + $0xa8] sm:$0xff]
    %v576 = vld [vmem:[#allocation3 + $0xb0] sm:$0xff]
    %v577 = vld [vmem:[#allocation3 + $0xb8] sm:$0xff]
    %v578 = vld [vmem:[#allocation3 + $0xc0] sm:$0xff]
    %v579 = vld [vmem:[#allocation3 + $0xc8] sm:$0xff]
    %v580 = vld [vmem:[#allocation3 + $0xd0] sm:$0xff]
    %v581 = vld [vmem:[#allocation3 + $0xd8] sm:$0xff]
    %v582 = vld [vmem:[#allocation3 + $0xe0] sm:$0xff]
    %v583 = vld [vmem:[#allocation3 + $0xe8] sm:$0xff]
    %v584 = vld [vmem:[#allocation3 + $0xf0] sm:$0xff]
    %v585 = vld [vmem:[#allocation3 + $0xf8] sm:$0xff]
    %v586 = vmul.f32 %v522, %v522
    %v587 = vmul.f32 %v523, %v523
    %v588 = vmul.f32 %v524, %v524
    %v589 = vmul.f32 %v525, %v525
    %v590 = vmul.f32 %v526, %v526
    %v591 = vmul.f32 %v527, %v527
    %v592 = vmul.f32 %v528, %v528
    %v593 = vmul.f32 %v529, %v529
    %v594 = vmul.f32 %v530, %v530
    %v595 = vmul.f32 %v531, %v531
    %v596 = vmul.f32 %v532, %v532
    %v597 = vmul.f32 %v533, %v533
    %v598 = vmul.f32 %v534, %v534
    %v599 = vmul.f32 %v535, %v535
    %v600 = vmul.f32 %v536, %v536
    %v601 = vmul.f32 %v537, %v537
    %v602 = vmul.f32 %v538, %v538
    %v603 = vmul.f32 %v539, %v539
    %v604 = vmul.f32 %v540, %v540
    %v605 = vmul.f32 %v541, %v541
    %v606 = vmul.f32 %v542, %v542
    %v607 = vmul.f32 %v543, %v543
    %v608 = vmul.f32 %v544, %v544
    %v609 = vmul.f32 %v545, %v545
    %v610 = vmul.f32 %v546, %v546
    %v611 = vmul.f32 %v547, %v547
    %v612 = vmul.f32 %v548, %v548
    %v613 = vmul.f32 %v549, %v549
    %v614 = vmul.f32 %v550, %v550
    %v615 = vmul.f32 %v551, %v551
    %v616 = vmul.f32 %v552, %v552
    %v617 = vmul.f32 %v553, %v553
    %v618 = vadd.f32 %v554, %v586
    %v619 = vadd.f32 %v555, %v587
    %v620 = vadd.f32 %v556, %v588
    %v621 = vadd.f32 %v557, %v589
    %v622 = vadd.f32 %v558, %v590
    %v623 = vadd.f32 %v559, %v591
    %v624 = vadd.f32 %v560, %v592
    %v625 = vadd.f32 %v561, %v593
    %v626 = vadd.f32 %v562, %v594
    %v627 = vadd.f32 %v563, %v595
    %v628 = vadd.f32 %v564, %v596
    %v629 = vadd.f32 %v565, %v597
    %v630 = vadd.f32 %v566, %v598
    %v631 = vadd.f32 %v567, %v599
    %v632 = vadd.f32 %v568, %v600
    %v633 = vadd.f32 %v569, %v601
    %v634 = vadd.f32 %v570, %v602
    %v635 = vadd.f32 %v571, %v603
    %v636 = vadd.f32 %v572, %v604
    %v637 = vadd.f32 %v573, %v605
    %v638 = vadd.f32 %v574, %v606
    %v639 = vadd.f32 %v575, %v607
    %v640 = vadd.f32 %v576, %v608
    %v641 = vadd.f32 %v577, %v609
    %v642 = vadd.f32 %v578, %v610
    %v643 = vadd.f32 %v579, %v611
    %v644 = vadd.f32 %v580, %v612
    %v645 = vadd.f32 %v581, %v613
    %v646 = vadd.f32 %v582, %v614
    %v647 = vadd.f32 %v583, %v615
    %v648 = vadd.f32 %v584, %v616
    %v649 = vadd.f32 %v585, %v617
    %vm650 = vcmask 7168
    %651 = vst.msk [vmem:[#allocation3] sm:$0xff] %vm650, %v618
    %652 = vst.msk [vmem:[#allocation3 + $0x8] sm:$0xff] %vm650, %v619
    %653 = vst.msk [vmem:[#allocation3 + $0x10] sm:$0xff] %vm650, %v620
    %654 = vst.msk [vmem:[#allocation3 + $0x18] sm:$0xff] %vm650, %v621
    %655 = vst.msk [vmem:[#allocation3 + $0x20] sm:$0xff] %vm650, %v622
    %656 = vst.msk [vmem:[#allocation3 + $0x28] sm:$0xff] %vm650, %v623
    %657 = vst.msk [vmem:[#allocation3 + $0x30] sm:$0xff] %vm650, %v624
    %658 = vst.msk [vmem:[#allocation3 + $0x38] sm:$0xff] %vm650, %v625
    %659 = vst.msk [vmem:[#allocation3 + $0x40] sm:$0xff] %vm650, %v626
    %660 = vst.msk [vmem:[#allocation3 + $0x48] sm:$0xff] %vm650, %v627
    %661 = vst.msk [vmem:[#allocation3 + $0x50] sm:$0xff] %vm650, %v628
    %662 = vst.msk [vmem:[#allocation3 + $0x58] sm:$0xff] %vm650, %v629
    %663 = vst.msk [vmem:[#allocation3 + $0x60] sm:$0xff] %vm650, %v630
    %664 = vst.msk [vmem:[#allocation3 + $0x68] sm:$0xff] %vm650, %v631
    %665 = vst.msk [vmem:[#allocation3 + $0x70] sm:$0xff] %vm650, %v632
    %666 = vst.msk [vmem:[#allocation3 + $0x78] sm:$0xff] %vm650, %v633
    %667 = vst.msk [vmem:[#allocation3 + $0x80] sm:$0xff] %vm650, %v634
    %668 = vst.msk [vmem:[#allocation3 + $0x88] sm:$0xff] %vm650, %v635
    %669 = vst.msk [vmem:[#allocation3 + $0x90] sm:$0xff] %vm650, %v636
    %670 = vst.msk [vmem:[#allocation3 + $0x98] sm:$0xff] %vm650, %v637
    %671 = vst.msk [vmem:[#allocation3 + $0xa0] sm:$0xff] %vm650, %v638
    %672 = vst.msk [vmem:[#allocation3 + $0xa8] sm:$0xff] %vm650, %v639
    %673 = vst.msk [vmem:[#allocation3 + $0xb0] sm:$0xff] %vm650, %v640
    %674 = vst.msk [vmem:[#allocation3 + $0xb8] sm:$0xff] %vm650, %v641
    %675 = vst.msk [vmem:[#allocation3 + $0xc0] sm:$0xff] %vm650, %v642
    %676 = vst.msk [vmem:[#allocation3 + $0xc8] sm:$0xff] %vm650, %v643
    %677 = vst.msk [vmem:[#allocation3 + $0xd0] sm:$0xff] %vm650, %v644
    %678 = vst.msk [vmem:[#allocation3 + $0xd8] sm:$0xff] %vm650, %v645
    %679 = vst.msk [vmem:[#allocation3 + $0xe0] sm:$0xff] %vm650, %v646
    %680 = vst.msk [vmem:[#allocation3 + $0xe8] sm:$0xff] %vm650, %v647
    %681 = vst.msk [vmem:[#allocation3 + $0xf0] sm:$0xff] %vm650, %v648
    %682 = vst.msk [vmem:[#allocation3 + $0xf8] sm:$0xff] %vm650, %v649
    // Predicated region
    $region42: #{tpu_custom_call.1} parent=1 // pred_check
      %p683 = pneg %p52
    $region43: #{tpu_custom_call.1} parent=1 // pred_check_branch
      %685 = sbr.rel (%p683) target = $region45
    $region44: #{tpu_custom_call.1} parent=1 // pred_region
      %s686 = sld [smem:[#allocation4]]
      %s687 = sld [smem:[#allocation4 + $0x3]]
      %v688 = vld [vmem:[#allocation2] sm:$0x3]
      %v690 = vlaneseq
      %v691 = vshrl.u32 %v690, 7
      %v692 = vsub.s32 0, %v691
      %v693 = vrot.slane %v688, %v692
      %v694 = vlaneseq
      %v695 = vshrl.u32 %v694, 7
      %v696 = vsub.s32 1, %v695
      %v697 = vrot.slane %v688, %v696
      %vm700 = vcmask 1040384
      %v701 = vsel %vm700, %v693, 0.0
      %v702 = vsel %vm700, %v697, 0.0
      %v703 = vadd.f32 %v701, %v702
      %704 = vadd.xlane.f32.xlu0 %v703
      %v705 = vpop.xlane.xlu0 %704
      %v706 = vrot.slane %v705, 4
      %v707 = vadd.f32 %v705, %v706
      %v708 = vrot.slane %v707, 2
      %v709 = vadd.f32 %v707, %v708
      %v710 = vrot.slane %v709, 1
      %v711 = vadd.f32 %v709, %v710
      %s712 = vtos %v711
      %s713 = smul.f32 %s686, %s687
      %v714 = vld [vmem:[#allocation3] sm:$0xff]
      %v715 = vld [vmem:[#allocation3 + $0x8] sm:$0xff]
      %v716 = vld [vmem:[#allocation3 + $0x10] sm:$0xff]
      %v717 = vld [vmem:[#allocation3 + $0x18] sm:$0xff]
      %v718 = vld [vmem:[#allocation3 + $0x20] sm:$0xff]
      %v719 = vld [vmem:[#allocation3 + $0x28] sm:$0xff]
      %v720 = vld [vmem:[#allocation3 + $0x30] sm:$0xff]
      %v721 = vld [vmem:[#allocation3 + $0x38] sm:$0xff]
      %v722 = vld [vmem:[#allocation3 + $0x40] sm:$0xff]
      %v723 = vld [vmem:[#allocation3 + $0x48] sm:$0xff]
      %v724 = vld [vmem:[#allocation3 + $0x50] sm:$0xff]
      %v725 = vld [vmem:[#allocation3 + $0x58] sm:$0xff]
      %v726 = vld [vmem:[#allocation3 + $0x60] sm:$0xff]
      %v727 = vld [vmem:[#allocation3 + $0x68] sm:$0xff]
      %v728 = vld [vmem:[#allocation3 + $0x70] sm:$0xff]
      %v729 = vld [vmem:[#allocation3 + $0x78] sm:$0xff]
      %v730 = vld [vmem:[#allocation3 + $0x80] sm:$0xff]
      %v731 = vld [vmem:[#allocation3 + $0x88] sm:$0xff]
      %v732 = vld [vmem:[#allocation3 + $0x90] sm:$0xff]
      %v733 = vld [vmem:[#allocation3 + $0x98] sm:$0xff]
      %v734 = vld [vmem:[#allocation3 + $0xa0] sm:$0xff]
      %v735 = vld [vmem:[#allocation3 + $0xa8] sm:$0xff]
      %v736 = vld [vmem:[#allocation3 + $0xb0] sm:$0xff]
      %v737 = vld [vmem:[#allocation3 + $0xb8] sm:$0xff]
      %v738 = vld [vmem:[#allocation3 + $0xc0] sm:$0xff]
      %v739 = vld [vmem:[#allocation3 + $0xc8] sm:$0xff]
      %v740 = vld [vmem:[#allocation3 + $0xd0] sm:$0xff]
      %v741 = vld [vmem:[#allocation3 + $0xd8] sm:$0xff]
      %v742 = vld [vmem:[#allocation3 + $0xe0] sm:$0xff]
      %v743 = vld [vmem:[#allocation3 + $0xe8] sm:$0xff]
      %v744 = vld [vmem:[#allocation3 + $0xf0] sm:$0xff]
      %v745 = vld [vmem:[#allocation3 + $0xf8] sm:$0xff]
      %v746 = vsel %vm650, %v714, 0.0
      %v747 = vsel %vm650, %v715, 0.0
      %v748 = vadd.f32 %v746, %v747
      %v749 = vsel %vm650, %v716, 0.0
      %v750 = vadd.f32 %v748, %v749
      %v751 = vsel %vm650, %v717, 0.0
      %v752 = vadd.f32 %v750, %v751
      %v753 = vsel %vm650, %v718, 0.0
      %v754 = vadd.f32 %v752, %v753
      %v755 = vsel %vm650, %v719, 0.0
      %v756 = vadd.f32 %v754, %v755
      %v757 = vsel %vm650, %v720, 0.0
      %v758 = vadd.f32 %v756, %v757
      %v759 = vsel %vm650, %v721, 0.0
      %v760 = vadd.f32 %v758, %v759
      %v761 = vsel %vm650, %v722, 0.0
      %v762 = vadd.f32 %v760, %v761
      %v763 = vsel %vm650, %v723, 0.0
      %v764 = vadd.f32 %v762, %v763
      %v765 = vsel %vm650, %v724, 0.0
      %v766 = vadd.f32 %v764, %v765
      %v767 = vsel %vm650, %v725, 0.0
      %v768 = vadd.f32 %v766, %v767
      %v769 = vsel %vm650, %v726, 0.0
      %v770 = vadd.f32 %v768, %v769
      %v771 = vsel %vm650, %v727, 0.0
      %v772 = vadd.f32 %v770, %v771
      %v773 = vsel %vm650, %v728, 0.0
      %v774 = vadd.f32 %v772, %v773
      %v775 = vsel %vm650, %v729, 0.0
      %v776 = vadd.f32 %v774, %v775
      %v777 = vsel %vm650, %v730, 0.0
      %v778 = vadd.f32 %v776, %v777
      %v779 = vsel %vm650, %v731, 0.0
      %v780 = vadd.f32 %v778, %v779
      %v781 = vsel %vm650, %v732, 0.0
      %v782 = vadd.f32 %v780, %v781
      %v783 = vsel %vm650, %v733, 0.0
      %v784 = vadd.f32 %v782, %v783
      %v785 = vsel %vm650, %v734, 0.0
      %v786 = vadd.f32 %v784, %v785
      %v787 = vsel %vm650, %v735, 0.0
      %v788 = vadd.f32 %v786, %v787
      %v789 = vsel %vm650, %v736, 0.0
      %v790 = vadd.f32 %v788, %v789
      %v791 = vsel %vm650, %v737, 0.0
      %v792 = vadd.f32 %v790, %v791
      %v793 = vsel %vm650, %v738, 0.0
      %v794 = vadd.f32 %v792, %v793
      %v795 = vsel %vm650, %v739, 0.0
      %v796 = vadd.f32 %v794, %v795
      %v797 = vsel %vm650, %v740, 0.0
      %v798 = vadd.f32 %v796, %v797
      %v799 = vsel %vm650, %v741, 0.0
      %v800 = vadd.f32 %v798, %v799
      %v801 = vsel %vm650, %v742, 0.0
      %v802 = vadd.f32 %v800, %v801
      %v803 = vsel %vm650, %v743, 0.0
      %v804 = vadd.f32 %v802, %v803
      %v805 = vsel %vm650, %v744, 0.0
      %v806 = vadd.f32 %v804, %v805
      %v807 = vsel %vm650, %v745, 0.0
      %v808 = vadd.f32 %v806, %v807
      %809 = vadd.xlane.f32.xlu0 %v808
      %v810 = vpop.xlane.xlu0 %809
      %v811 = vrot.slane %v810, 4
      %v812 = vadd.f32 %v810, %v811
      %v813 = vrot.slane %v812, 2
      %v814 = vadd.f32 %v812, %v813
      %v815 = vrot.slane %v814, 1
      %v816 = vadd.f32 %v814, %v815
      %s817 = vtos %v816
      %s818 = smul.f32 %s713, %s817
      %s819 = sadd.f32 %s712, %s818
      %s820 = scalar_lea.smem [#allocation9], 0
      %821 = sst [smem:[%s820]] %s819
    $region45: #{tpu_custom_call.1} parent=1 // pred_fallthru
      _
    // Predicated region
    $region46: #{tpu_custom_call.1} parent=1 // pred_check
      _
    $region47: #{tpu_custom_call.1} parent=1 // pred_check_branch
      %823 = sbr.rel (0) target = $region49
    $region48: #{tpu_custom_call.1} parent=1 // pred_region
      %s825 = ssub.s32 16, 16
      %826 = vsyncadd [#allocation5], %s825
      %829 = dma.smem_to_hbm [#allocation9], 16, %s7, [#allocation5]
    $region49: #{tpu_custom_call.1} parent=1 // pred_fallthru
      _
    // Predicated region
    $region50: #{tpu_custom_call.1} parent=1 // pred_check
      _
    $region51: #{tpu_custom_call.1} parent=1 // pred_check_branch
      %831 = sbr.rel (0) target = $region53
    $region52: #{tpu_custom_call.1} parent=1 // pred_region
      %832 = dma.done [#allocation5], 16
    $region53: #{tpu_custom_call.1} parent=1 // pred_fallthru
      _
    %833 = sfence
    %834 = vsyncpa [#allocation5], 1
    %835 = vsyncpa [#allocation6], 1
    %836 = vsyncpa [#allocation8], 1

</llo_original>
